<compile_context>
chip_gen: v6e
topology: v6e:2x2x1
jax: 0.10.0
libtpu: 0.0.40
codegen_flags: <defaults>
</compile_context>

<pallas_src>
import jax
import jax.numpy as jnp
from jax.experimental import pallas as pl
from jax.experimental.pallas import tpu as pltpu  # noqa: F401  (TPU backend)


def _class_embedding_kernel(emb_ref, o_ref):
    # Single dense VMEM-tile copy of the class token. No MXU/EUP/XLU; the
    # only active VLIW resource is a few vld/vst slots.
    o_ref[...] = emb_ref[...]


def class_embedding_forward(x: jax.Array, embedding: jax.Array) -> jax.Array:
    """Pallas equivalent of ClassEmbedding.forward.

    Args:
      x: ignored input (kept only to preserve the module call signature).
         It is NOT passed to the kernel, so it creates no data dependency.
      embedding: class-token parameter of shape (1, 1, embed_dim).

    Returns:
      Array of shape (1, 1, embed_dim) equal to `embedding`.
    """
    del x  # The module ignores its input entirely.

    assert embedding.ndim == 3 and embedding.shape[:2] == (1, 1)
    embed_dim = embedding.shape[-1]
    itemsize = jnp.dtype(embedding.dtype).itemsize

    # Lane-dense (and, for big embed dims, sublane-dense) view: pad the lane
    # axis to a multiple of 128 and fold it into (rows, 128) so the kernel
    # moves full vregs with unmasked stores.
    lanes = 128
    padded = ((embed_dim + lanes - 1) // lanes) * lanes
    rows = padded // lanes

    emb_flat = embedding.reshape(embed_dim)
    if padded != embed_dim:
        emb_flat = jnp.pad(emb_flat, (0, padded - embed_dim))
    emb_tile = emb_flat.reshape(rows, lanes)

    out_tile = pl.pallas_call(
        _class_embedding_kernel,
        out_shape=jax.ShapeDtypeStruct((rows, lanes), embedding.dtype),
        grid=(),
        in_specs=[
            # Single full-extent block of the (tiny) parameter.
            pl.BlockSpec((rows, lanes), lambda: (0, 0)),
        ],
        out_specs=pl.BlockSpec((rows, lanes), lambda: (0, 0)),
        # Truthful cost: only the tiny (padded) parameter is read + written.
        cost_estimate=pl.CostEstimate(
            flops=0,
            transcendentals=0,
            bytes_accessed=2 * padded * itemsize,
        ),
    )(emb_tile)

    # Undo the lane padding / reshape in the wrapper.
    return out_tile.reshape(padded)[:embed_dim].reshape(1, 1, embed_dim)


if __name__ == "__main__":
    key = jax.random.PRNGKey(0)
    k_x, k_emb = jax.random.split(key)

    batch, channels, spatial = 2, 4, 16
    embed_dim = 32

    # Deterministic "parameter" init, mimicking torch.rand(1, 1, embed_dim).
    embedding = jax.random.uniform(
        k_emb, (1, 1, embed_dim), dtype=jnp.float32
    )
    # Ignored input (NCHW, as a PyTorch conv-style tensor would be).
    x = jax.random.normal(
        k_x, (batch, channels, spatial, spatial), dtype=jnp.float32
    )

    fwd = jax.jit(class_embedding_forward)
    out = fwd(x, embedding)
    out = jax.block_until_ready(out)

    assert out.shape == (1, 1, embed_dim)
    assert out.dtype == embedding.dtype
    assert jnp.allclose(out, embedding)

    print("KERNEL_OK")
</pallas_src>

<mosaic_0001>
module attributes {stable_mosaic.version = 11 : i64} {
  func.func @_class_embedding_kernel(%arg0: memref<1x128xf32, #tpu.memory_space<vmem>>, %arg1: memref<1x128xf32, #tpu.memory_space<vmem>>) attributes {dimension_semantics = [], scalar_prefetch = 0 : i64, scratch_operands = 0 : i64, tpu.core_type = #tpu.core_type<tc>} {
    %c0 = arith.constant 0 : index
    %c0_0 = arith.constant 0 : index
    %0 = vector.load %arg0[%c0, %c0_0] : memref<1x128xf32, #tpu.memory_space<vmem>>, vector<1x128xf32>
    %c0_1 = arith.constant 0 : index
    %c0_2 = arith.constant 0 : index
    %1 = vector.load %arg1[%c0_1, %c0_2] : memref<1x128xf32, #tpu.memory_space<vmem>>, vector<1x128xf32>
    tpu.vector_store %arg1[%c0_1, %c0_2], %0 {strides = array<i32>} : memref<1x128xf32, #tpu.memory_space<vmem>>, vector<1x128xf32>,
    return
  }
}

</mosaic_0001>

<llo_original>
// kernel: class_embedding_forward.1
$region0: #{class_embedding_forward.1}
  #allocation0 [shape = 'u32[]', space=smem, size = 0x4, offset = 0x4, fixed_abs, tag = 'smem constant byte address 0x4 - core index']
  #allocation1 [shape = 'u32[144,128]{1,0:T(1,128)}', space=vmem, size = 0x12000, scoped, tag = 'internal scratch']
  %s0 = inlined_call_operand.vmem [shape: f32[1,128], index: 0, kind: input, shape index: {}]
  %s1 = inlined_call_operand.vmem [shape: f32[1,128], index: 1, kind: output, shape index: {}]
  %s2 = sld [smem:[#allocation0]]
  $region14: #{class_embedding_forward.1} parent=0
    _
  %s4 = ssub.s32 1, %s2
  %s5 = scalar_select 0, %s4, %s2
  // Predicated region
  $region2: #{class_embedding_forward.1} parent=0 // pred_check
    _
  $region3: #{class_embedding_forward.1} parent=0 // pred_check_branch
    %7 = sbr.rel (0) target = $region5
  $region4: #{class_embedding_forward.1} parent=0 // pred_region
    _
  $region5: #{class_embedding_forward.1} parent=0 // pred_fallthru
    _
  %v8 = vld [vmem:[%s0] sm:$0x1]
  %9 = vst [vmem:[%s1] sm:$0x1] %v8
  // Predicated region
  $region6: #{class_embedding_forward.1} parent=0 // pred_check
    _
  $region7: #{class_embedding_forward.1} parent=0 // pred_check_branch
    %11 = sbr.rel (0) target = $region9
  $region8: #{class_embedding_forward.1} parent=0 // pred_region
    _
  $region9: #{class_embedding_forward.1} parent=0 // pred_fallthru
    _
  // Predicated region
  $region10: #{class_embedding_forward.1} parent=0 // pred_check
    _
  $region11: #{class_embedding_forward.1} parent=0 // pred_check_branch
    %13 = sbr.rel (0) target = $region13
  $region12: #{class_embedding_forward.1} parent=0 // pred_region
    _
  $region13: #{class_embedding_forward.1} parent=0 // pred_fallthru
    _

</llo_original>
